<compile_context>
chip_gen: v7x
topology: tpu7x:2x2x1
jax: 0.10.0
libtpu: 0.0.40
codegen_flags: <defaults>
</compile_context>

<pallas_src>
import functools
import math

import jax
import jax.numpy as jnp
from jax.experimental import pallas as pl
from jax.experimental.pallas import tpu as pltpu


def _round_up(a, m):
    return ((a + m - 1) // m) * m


def _type_embed_kernel(ids_ref, tab_ref, out_ref, *, num_types):
    # ids_ref: (R, P) int32   -- P consecutive token ids per packed output row
    # tab_ref: (n_splits, K_pad, P*H) bf16 -- block-diagonal packed table splits
    # out_ref: (R, P*H)       -- lane-dense packed embeddings
    R, P = ids_ref.shape
    n_splits, K, _ = tab_ref.shape

    # Clamp ids (OOB containment), then shift token j of each packed group
    # into its own vocab block [j*V, (j+1)*V) so one one-hot row selects all
    # P embeddings at once.
    ids = jnp.clip(ids_ref[...], 0, num_types - 1)
    ids = ids + jax.lax.broadcasted_iota(jnp.int32, (R, P), 1) * num_types

    col = jax.lax.broadcasted_iota(jnp.int32, (R, K), 1)
    hit = ids[:, 0:1] == col
    for j in range(1, P):                      # P is small & static -> unrolled
        hit = jnp.logical_or(hit, ids[:, j:j + 1] == col)
    one_hot = hit.astype(jnp.bfloat16)         # exact 0/1, single-pass MXU dtype

    acc = jnp.dot(one_hot, tab_ref[0], preferred_element_type=jnp.float32)
    for s in range(1, n_splits):               # hi/mid/lo splits -> exact gather
        acc = acc + jnp.dot(one_hot, tab_ref[s],
                            preferred_element_type=jnp.float32)
    out_ref[...] = acc.astype(out_ref.dtype)


def pack_type_embedding_table(emb_table, *, max_table_vmem_bytes=8 << 20):
    """Build the block-diagonal packed (and bf16 hi/mid/lo split) table ONCE.

    Returns (packed_tables, (num_types, h_dim, tokens_per_row)) where
    packed_tables has shape (n_splits, K_pad, P*H) in bf16.
    """
    V, H = emb_table.shape

    # Pack P consecutive tokens per output row: 256 lanes fills the 256-wide
    # v6e/v7x MXU and gives unmasked vector stores; 128 is the fallback.
    if 256 % H == 0:
        P = 256 // H
    elif 128 % H == 0:
        P = 128 // H
    else:
        P = 1   # output rows stay H wide (masked stores if H % 128 != 0)

    # f32 tables use an exact bf16 hi/mid/lo split (3 single-pass matmuls);
    # already-narrow tables need a single pass.
    n_splits = 3 if emb_table.dtype == jnp.float32 else 1

    # Shrink P if the VMEM-resident packed table would get too big (large V).
    while P > 1 and (_round_up(P * V, 128) * (P * H) * 2 * n_splits
                     > max_table_vmem_bytes):
        P //= 2

    K_pad = _round_up(P * V, 128)
    emb_f32 = emb_table.astype(jnp.float32)
    packed = jnp.zeros((K_pad, P * H), jnp.float32)
    for j in range(P):
        packed = packed.at[j * V:(j + 1) * V, j * H:(j + 1) * H].set(emb_f32)

    if n_splits == 3:
        hi = packed.astype(jnp.bfloat16)
        r1 = packed - hi.astype(jnp.float32)
        mid = r1.astype(jnp.bfloat16)
        lo = (r1 - mid.astype(jnp.float32)).astype(jnp.bfloat16)
        tables = jnp.stack([hi, mid, lo])
    else:
        # TODO(synk): float16 tables lose ~3 mantissa bits through this bf16 cast.
        tables = packed.astype(jnp.bfloat16)[None]
    return tables, (V, H, P)


def type_embedding_packed(seq_types, packed_tables, *, num_types, h_dim,
                          tokens_per_row, out_dtype=jnp.float32,
                          tile_tokens=8192):
    """Embedding lookup using a pre-packed table (pack_type_embedding_table)."""
    V, H, P = num_types, h_dim, tokens_per_row
    n_splits, K_pad, PH = packed_tables.shape
    assert PH == P * H

    orig_shape = seq_types.shape
    N = math.prod(orig_shape)

    # ---- tile selection ------------------------------------------------------
    sub = 8 * P                                   # token granule: 8 sublanes/row
    out_bytes_per_row = PH * jnp.dtype(out_dtype).itemsize
    max_rows = max(8, (4 << 20) // out_bytes_per_row)   # ~4 MiB out block cap
    tile = max(sub, min(tile_tokens, max_rows * P))
    tile = (tile // sub) * sub                    # sublane-aligned R_tile
    if N > sub:
        # >= 2 grid steps so v7x can shard the "parallel" axis over both TCs,
        # and padding waste stays bounded for mid-size N.
        tile = min(tile, _round_up(-(-N // 2), sub))
    tile = max(sub, min(tile, _round_up(N, sub)))
    N_pad = _round_up(max(N, 1), tile)

    ids = seq_types.reshape(N).astype(jnp.int32)
    if N_pad != N:
        # Pad with the padding index (zero row); padded rows are sliced off below.
        ids = jnp.concatenate(
            [ids, jnp.full((N_pad - N,), V - 1, dtype=jnp.int32)])

    R_total = N_pad // P
    R_tile = tile // P
    ids2d = ids.reshape(R_total, P)

    kernel = functools.partial(_type_embed_kernel, num_types=V)
    out_packed = pl.pallas_call(
        kernel,
        out_shape=jax.ShapeDtypeStruct((R_total, PH), out_dtype),
        grid_spec=pltpu.PrefetchScalarGridSpec(
            num_scalar_prefetch=0,
            grid=(R_total // R_tile,),
            in_specs=[
                pl.BlockSpec((R_tile, P), lambda i: (i, 0)),              # ids
                pl.BlockSpec((n_splits, K_pad, PH), lambda i: (0, 0, 0)), # table (resident)
            ],
            out_specs=pl.BlockSpec((R_tile, PH), lambda i: (i, 0)),
        ),
        compiler_params=pltpu.CompilerParams(
            dimension_semantics=("parallel",)),
    )(ids2d, packed_tables)

    # (R_total, P*H) -> (N_pad, H) is a contiguous (free) reshape.
    return out_packed.reshape(N_pad, H)[:N].reshape(*orig_shape, H)


def type_embedding(seq_types, emb_table, *, tile_tokens=8192):
    """One-shot forward.  For repeated calls, pack once with
    pack_type_embedding_table() and call type_embedding_packed()."""
    tables, (V, H, P) = pack_type_embedding_table(emb_table)
    return type_embedding_packed(
        seq_types, tables, num_types=V, h_dim=H, tokens_per_row=P,
        out_dtype=emb_table.dtype, tile_tokens=tile_tokens)


def init_type_embedding_params(key, h_dim, type_dim):
    """Init matching nn.Embedding(type_dim+1, h_dim, padding_idx=type_dim)."""
    V = type_dim + 1
    table = jax.random.normal(key, (V, h_dim), dtype=jnp.float32)
    table = table.at[type_dim, :].set(0.0)   # padding_idx row is zero
    return table


if __name__ == "__main__":
    key = jax.random.PRNGKey(0)
    k_tab, k_ids = jax.random.split(key)

    h_dim = 32
    type_dim = 10
    B, S = 2, 8

    emb_table = init_type_embedding_params(k_tab, h_dim, type_dim)
    # ids in [0, type_dim] inclusive (type_dim == padding index -> zero row)
    seq_types = jax.random.randint(k_ids, (B, S), 0, type_dim + 1,
                                   dtype=jnp.int32)

    # Pack once (hoisted out of the per-step path), then run the kernel.
    tables, (V, H, P) = pack_type_embedding_table(emb_table)
    fwd = jax.jit(functools.partial(
        type_embedding_packed, num_types=V, h_dim=H, tokens_per_row=P,
        out_dtype=emb_table.dtype))
    out = jax.block_until_ready(fwd(seq_types, tables))

    # Reference check (plain JAX gather).
    ref = jnp.take(emb_table, seq_types, axis=0)
    assert out.shape == (B, S, h_dim)
    assert bool(jnp.allclose(out, ref, atol=1e-6, rtol=1e-5)), \
        "mismatch vs reference embedding lookup"
    # Padding index (== type_dim) must map to an exactly-zero row.
    pad_mask = (seq_types == type_dim)[..., None]
    assert bool(jnp.all(jnp.where(pad_mask, out == 0.0, True)))

    print("KERNEL_OK")
</pallas_src>

<mosaic_0001>
module attributes {stable_mosaic.version = 11 : i64} {
  func.func @_type_embed_kernel(%arg0: i32, %arg1: memref<8x8xi32, #tpu.memory_space<vmem>>, %arg2: memref<3x128x256xbf16, #tpu.memory_space<vmem>>, %arg3: memref<8x256xf32, #tpu.memory_space<vmem>>) attributes {dimension_semantics = [#tpu.dimension_semantics<parallel>], iteration_bounds = array<i64: 1>, scalar_prefetch = 0 : i64, scratch_operands = 0 : i64, tpu.core_type = #tpu.core_type<tc>, window_params = [{transform_indices = @transform_0, window_bounds = array<i64: 8, 8>}, {pipeline_mode = #tpu.pipeline_mode<synchronous>, transform_indices = @transform_1, window_bounds = array<i64: 3, 128, 256>}, {transform_indices = @transform_2, window_bounds = array<i64: 8, 256>}]} {
    %c0 = arith.constant 0 : index
    %c0_0 = arith.constant 0 : index
    %0 = vector.load %arg1[%c0, %c0_0] : memref<8x8xi32, #tpu.memory_space<vmem>>, vector<8x8xi32>
    %c0_i32 = arith.constant 0 : i32
    %c10_i32 = arith.constant 10 : i32
    %1 = vector.broadcast %c0_i32 : i32 to vector<8x8xi32>
    %2 = arith.maxsi %1, %0 : vector<8x8xi32>
    %3 = vector.broadcast %c10_i32 : i32 to vector<8x8xi32>
    %4 = arith.minsi %3, %2 : vector<8x8xi32>
    %5 = tpu.iota {dimensions = array<i32: 1>} : vector<8x8xi32>
    %c11_i32 = arith.constant 11 : i32
    %6 = vector.broadcast %c11_i32 : i32 to vector<8x8xi32>
    %7 = arith.muli %5, %6 : vector<8x8xi32>
    %8 = arith.addi %4, %7 : vector<8x8xi32>
    %9 = tpu.iota {dimensions = array<i32: 1>} : vector<8x128xi32>
    %10 = vector.extract_strided_slice %8 {offsets = [0, 0], sizes = [8, 1], strides = [1, 1]} : vector<8x8xi32> to vector<8x1xi32>
    %11 = vector.broadcast %10 : vector<8x1xi32> to vector<8x128xi32>
    %12 = arith.cmpi eq, %11, %9 : vector<8x128xi32>
    %13 = vector.extract_strided_slice %8 {offsets = [0, 1], sizes = [8, 1], strides = [1, 1]} : vector<8x8xi32> to vector<8x1xi32>
    %14 = vector.broadcast %13 : vector<8x1xi32> to vector<8x128xi32>
    %15 = arith.cmpi eq, %14, %9 : vector<8x128xi32>
    %16 = arith.ori %12, %15 : vector<8x128xi1>
    %17 = vector.extract_strided_slice %8 {offsets = [0, 2], sizes = [8, 1], strides = [1, 1]} : vector<8x8xi32> to vector<8x1xi32>
    %18 = vector.broadcast %17 : vector<8x1xi32> to vector<8x128xi32>
    %19 = arith.cmpi eq, %18, %9 : vector<8x128xi32>
    %20 = arith.ori %16, %19 : vector<8x128xi1>
    %21 = vector.extract_strided_slice %8 {offsets = [0, 3], sizes = [8, 1], strides = [1, 1]} : vector<8x8xi32> to vector<8x1xi32>
    %22 = vector.broadcast %21 : vector<8x1xi32> to vector<8x128xi32>
    %23 = arith.cmpi eq, %22, %9 : vector<8x128xi32>
    %24 = arith.ori %20, %23 : vector<8x128xi1>
    %25 = vector.extract_strided_slice %8 {offsets = [0, 4], sizes = [8, 1], strides = [1, 1]} : vector<8x8xi32> to vector<8x1xi32>
    %26 = vector.broadcast %25 : vector<8x1xi32> to vector<8x128xi32>
    %27 = arith.cmpi eq, %26, %9 : vector<8x128xi32>
    %28 = arith.ori %24, %27 : vector<8x128xi1>
    %29 = vector.extract_strided_slice %8 {offsets = [0, 5], sizes = [8, 1], strides = [1, 1]} : vector<8x8xi32> to vector<8x1xi32>
    %30 = vector.broadcast %29 : vector<8x1xi32> to vector<8x128xi32>
    %31 = arith.cmpi eq, %30, %9 : vector<8x128xi32>
    %32 = arith.ori %28, %31 : vector<8x128xi1>
    %33 = vector.extract_strided_slice %8 {offsets = [0, 6], sizes = [8, 1], strides = [1, 1]} : vector<8x8xi32> to vector<8x1xi32>
    %34 = vector.broadcast %33 : vector<8x1xi32> to vector<8x128xi32>
    %35 = arith.cmpi eq, %34, %9 : vector<8x128xi32>
    %36 = arith.ori %32, %35 : vector<8x128xi1>
    %37 = vector.extract_strided_slice %8 {offsets = [0, 7], sizes = [8, 1], strides = [1, 1]} : vector<8x8xi32> to vector<8x1xi32>
    %38 = vector.broadcast %37 : vector<8x1xi32> to vector<8x128xi32>
    %39 = arith.cmpi eq, %38, %9 : vector<8x128xi32>
    %40 = arith.ori %36, %39 : vector<8x128xi1>
    %41 = arith.extui %40 : vector<8x128xi1> to vector<8x128xi32>
    %42 = arith.sitofp %41 : vector<8x128xi32> to vector<8x128xf32>
    %43 = arith.truncf %42 : vector<8x128xf32> to vector<8x128xbf16>
    %c0_1 = arith.constant 0 : index
    %c0_2 = arith.constant 0 : index
    %c0_3 = arith.constant 0 : index
    %44 = vector.load %arg2[%c0_1, %c0_2, %c0_3] : memref<3x128x256xbf16, #tpu.memory_space<vmem>>, vector<1x128x256xbf16>
    %45 = vector.shape_cast %44 : vector<1x128x256xbf16> to vector<128x256xbf16>
    %cst = arith.constant dense<0.000000e+00> : vector<8x256xf32>
    %46 = tpu.matmul %43, %45, %cst {dimension_numbers = #tpu.dot_dimension_numbers<[1], [0], [0], [1], [0, 0, 1, 1], [], []>} : vector<8x128xbf16>, vector<128x256xbf16>, vector<8x256xf32> -> vector<8x256xf32>
    %c1 = arith.constant 1 : index
    %c0_4 = arith.constant 0 : index
    %c0_5 = arith.constant 0 : index
    %47 = vector.load %arg2[%c1, %c0_4, %c0_5] : memref<3x128x256xbf16, #tpu.memory_space<vmem>>, vector<1x128x256xbf16>
    %48 = vector.shape_cast %47 : vector<1x128x256xbf16> to vector<128x256xbf16>
    %cst_6 = arith.constant dense<0.000000e+00> : vector<8x256xf32>
    %49 = tpu.matmul %43, %48, %cst_6 {dimension_numbers = #tpu.dot_dimension_numbers<[1], [0], [0], [1], [0, 0, 1, 1], [], []>} : vector<8x128xbf16>, vector<128x256xbf16>, vector<8x256xf32> -> vector<8x256xf32>
    %50 = arith.addf %46, %49 : vector<8x256xf32>
    %c2 = arith.constant 2 : index
    %c0_7 = arith.constant 0 : index
    %c0_8 = arith.constant 0 : index
    %51 = vector.load %arg2[%c2, %c0_7, %c0_8] : memref<3x128x256xbf16, #tpu.memory_space<vmem>>, vector<1x128x256xbf16>
    %52 = vector.shape_cast %51 : vector<1x128x256xbf16> to vector<128x256xbf16>
    %cst_9 = arith.constant dense<0.000000e+00> : vector<8x256xf32>
    %53 = tpu.matmul %43, %52, %cst_9 {dimension_numbers = #tpu.dot_dimension_numbers<[1], [0], [0], [1], [0, 0, 1, 1], [], []>} : vector<8x128xbf16>, vector<128x256xbf16>, vector<8x256xf32> -> vector<8x256xf32>
    %54 = arith.addf %50, %53 : vector<8x256xf32>
    %c0_10 = arith.constant 0 : index
    %c0_11 = arith.constant 0 : index
    %55 = vector.load %arg3[%c0_10, %c0_11] : memref<8x256xf32, #tpu.memory_space<vmem>>, vector<8x256xf32>
    tpu.vector_store %arg3[%c0_10, %c0_11], %54 {strides = array<i32>} : memref<8x256xf32, #tpu.memory_space<vmem>>, vector<8x256xf32>,
    return
  }
  func.func @transform_0(%arg0: i32) -> (i32, i32) {
    %c0_i32 = arith.constant 0 : i32
    %c0_i32_0 = arith.constant 0 : i32
    return %arg0, %c0_i32 : i32, i32
  }
  func.func @transform_1(%arg0: i32) -> (i32, i32, i32) {
    %c0_i32 = arith.constant 0 : i32
    %c0_i32_0 = arith.constant 0 : i32
    %c0_i32_1 = arith.constant 0 : i32
    %c0_i32_2 = arith.constant 0 : i32
    return %c0_i32, %c0_i32_0, %c0_i32_1 : i32, i32, i32
  }
  func.func @transform_2(%arg0: i32) -> (i32, i32) {
    %c0_i32 = arith.constant 0 : i32
    %c0_i32_0 = arith.constant 0 : i32
    return %arg0, %c0_i32 : i32, i32
  }
}

</mosaic_0001>

<llo_original>
// kernel: type_embedding_packed.1
$region0: #{type_embedding_packed.1}
  #allocation0 [shape = 'u32[]', space=smem, size = 0x4, offset = 0x4, fixed_abs, tag = 'smem constant byte address 0x4 - core index']
  #allocation1 [shape = 'u32[144,128]{1,0:T(1,128)}', space=vmem, size = 0x12000, scoped, tag = 'internal scratch']
  %s0 = inlined_call_operand.vmem [shape: s32[8,8], index: 0, kind: input, shape index: {}]
  %s1 = inlined_call_operand.hbm [shape: bf16[3,128,256], index: 1, kind: input, shape index: {}]
  %s2 = inlined_call_operand.vmem [shape: f32[8,256], index: 2, kind: output, shape index: {}]
  %s3 = sld [smem:[#allocation0]]
  $region22: #{type_embedding_packed.1} parent=0
    _
  %s5 = ssub.s32 1, %s3
  %s6 = scalar_select 0, %s5, %s3
  $region1: #{type_embedding_packed.1} parent=0
    #allocation2 [shape = 'u8[196608]{0}', space=vmem, size = 0x30000, scoped, tag = 'input window, operand 1, single buffered']
    #allocation3 [shape = 's32[1]{0}', space=sflag, size = 0x4, scoped, tag = 'scoped memory for type_embedding_packed.1']
    %7 = vsyncpa [#allocation3], 0
    // Predicated region
    $region2: #{type_embedding_packed.1} parent=1 // pred_check
      _
    $region3: #{type_embedding_packed.1} parent=1 // pred_check_branch
      %9 = sbr.rel (0) target = $region5
    $region4: #{type_embedding_packed.1} parent=1 // pred_region
      _
    $region5: #{type_embedding_packed.1} parent=1 // pred_fallthru
      _
    // Predicated region
    $region6: #{type_embedding_packed.1} parent=1 // pred_check
      _
    $region7: #{type_embedding_packed.1} parent=1 // pred_check_branch
      %11 = sbr.rel (0) target = $region9
    $region8: #{type_embedding_packed.1} parent=1 // pred_region
      %s13 = ssub.s32 6144, 6144
      %14 = vsyncadd [#allocation3], %s13
      %s15 = sshll.u32 [#allocation2], 4
      %s16 = int_to_ptr.vmem [resolvable:$true] %s15
      %21 = dma.hbm_to_vmem [thread:$0]  %s1, 6144, %s16, [#allocation3], 128, 128, 8
    $region9: #{type_embedding_packed.1} parent=1 // pred_fallthru
      _
    // Predicated region
    $region10: #{type_embedding_packed.1} parent=1 // pred_check
      _
    $region11: #{type_embedding_packed.1} parent=1 // pred_check_branch
      %23 = sbr.rel (0) target = $region13
    $region12: #{type_embedding_packed.1} parent=1 // pred_region
      %24 = dma.done [#allocation3], 6144
    $region13: #{type_embedding_packed.1} parent=1 // pred_fallthru
      _
    %v26 = vld [vmem:[%s0] sm:$0xff]
    %vm27 = vcmp.gt.s32.totalorder %v26, 0
    %v28 = vsel %vm27, %v26, 0
    %vm29 = vcmp.lt.s32.totalorder %v28, 10
    %v30 = vsel %vm29, %v28, 10
    %v31 = vlaneseq
    %v32 = vand.u32 %v31, 127
    %v33 = vmul.u32 %v32, 11
    %v34 = vadd.s32 %v30, %v33
    %35 = vset.pattern.permute.xlu0 0
    %36 = vperm.xlu0 %35, %v34
    %v37 = vpop.permute.xlu0 %36
    %vm38 = vcmp.eq.s32.totalorder %v37, %v32
    %39 = vset.pattern.permute.xlu0 1
    %40 = vperm.xlu0 %39, %v34
    %v41 = vpop.permute.xlu0 %40
    %vm42 = vcmp.eq.s32.totalorder %v41, %v32
    %vm43 = vmor %vm38, %vm42
    %44 = vset.pattern.permute.xlu0 2
    %45 = vperm.xlu0 %44, %v34
    %v46 = vpop.permute.xlu0 %45
    %vm47 = vcmp.eq.s32.totalorder %v46, %v32
    %vm48 = vmor %vm43, %vm47
    %49 = vset.pattern.permute.xlu0 3
    %50 = vperm.xlu0 %49, %v34
    %v51 = vpop.permute.xlu0 %50
    %vm52 = vcmp.eq.s32.totalorder %v51, %v32
    %vm53 = vmor %vm48, %vm52
    %54 = vset.pattern.permute.xlu0 4
    %55 = vperm.xlu0 %54, %v34
    %v56 = vpop.permute.xlu0 %55
    %vm57 = vcmp.eq.s32.totalorder %v56, %v32
    %vm58 = vmor %vm53, %vm57
    %59 = vset.pattern.permute.xlu0 5
    %60 = vperm.xlu0 %59, %v34
    %v61 = vpop.permute.xlu0 %60
    %vm62 = vcmp.eq.s32.totalorder %v61, %v32
    %vm63 = vmor %vm58, %vm62
    %64 = vset.pattern.permute.xlu0 6
    %65 = vperm.xlu0 %64, %v34
    %v66 = vpop.permute.xlu0 %65
    %vm67 = vcmp.eq.s32.totalorder %v66, %v32
    %vm68 = vmor %vm63, %vm67
    %69 = vset.pattern.permute.xlu0 7
    %70 = vperm.xlu0 %69, %v34
    %v71 = vpop.permute.xlu0 %70
    %vm72 = vcmp.eq.s32.totalorder %v71, %v32
    %vm73 = vmor %vm68, %vm72
    %v74 = vsel %vm73, 1, 0
    %v75 = vcvt.s32.f32 %v74
    %v76 = vpack.c.bf16 %v75, %v75
    %v77 = vld [vmem:[#allocation2] sm:$0xff]
    %v78 = vld [vmem:[#allocation2 + $0x8] sm:$0xff]
    %v79 = vld [vmem:[#allocation2 + $0x10] sm:$0xff]
    %v80 = vld [vmem:[#allocation2 + $0x18] sm:$0xff]
    %v81 = vld [vmem:[#allocation2 + $0x20] sm:$0xff]
    %v82 = vld [vmem:[#allocation2 + $0x28] sm:$0xff]
    %v83 = vld [vmem:[#allocation2 + $0x30] sm:$0xff]
    %v84 = vld [vmem:[#allocation2 + $0x38] sm:$0xff]
    %v85 = vld [vmem:[#allocation2 + $0x40] sm:$0xff]
    %v86 = vld [vmem:[#allocation2 + $0x48] sm:$0xff]
    %v87 = vld [vmem:[#allocation2 + $0x50] sm:$0xff]
    %v88 = vld [vmem:[#allocation2 + $0x58] sm:$0xff]
    %v89 = vld [vmem:[#allocation2 + $0x60] sm:$0xff]
    %v90 = vld [vmem:[#allocation2 + $0x68] sm:$0xff]
    %v91 = vld [vmem:[#allocation2 + $0x70] sm:$0xff]
    %v92 = vld [vmem:[#allocation2 + $0x78] sm:$0xff]
    %s93 = scalar_lea.vmem [#allocation2], 128
    %v94 = vld [vmem:[%s93] sm:$0xff]
    %v95 = vld [vmem:[%s93 + $0x8] sm:$0xff]
    %v96 = vld [vmem:[%s93 + $0x10] sm:$0xff]
    %v97 = vld [vmem:[%s93 + $0x18] sm:$0xff]
    %v98 = vld [vmem:[%s93 + $0x20] sm:$0xff]
    %v99 = vld [vmem:[%s93 + $0x28] sm:$0xff]
    %v100 = vld [vmem:[%s93 + $0x30] sm:$0xff]
    %v101 = vld [vmem:[%s93 + $0x38] sm:$0xff]
    %v102 = vld [vmem:[%s93 + $0x40] sm:$0xff]
    %v103 = vld [vmem:[%s93 + $0x48] sm:$0xff]
    %v104 = vld [vmem:[%s93 + $0x50] sm:$0xff]
    %v105 = vld [vmem:[%s93 + $0x58] sm:$0xff]
    %v106 = vld [vmem:[%s93 + $0x60] sm:$0xff]
    %v107 = vld [vmem:[%s93 + $0x68] sm:$0xff]
    %v108 = vld [vmem:[%s93 + $0x70] sm:$0xff]
    %v109 = vld [vmem:[%s93 + $0x78] sm:$0xff]
    %v126 = vunpack.c.l.b16 %v94
    %v127 = vunpack.c.h.b16 %v94
    %v128 = vunpack.c.l.b16 %v95
    %v129 = vunpack.c.h.b16 %v95
    %v130 = vunpack.c.l.b16 %v96
    %v131 = vunpack.c.h.b16 %v96
    %v132 = vunpack.c.l.b16 %v97
    %v133 = vunpack.c.h.b16 %v97
    %v134 = vunpack.c.l.b16 %v98
    %v135 = vunpack.c.h.b16 %v98
    %v136 = vunpack.c.l.b16 %v99
    %v137 = vunpack.c.h.b16 %v99
    %v138 = vunpack.c.l.b16 %v100
    %v139 = vunpack.c.h.b16 %v100
    %v140 = vunpack.c.l.b16 %v101
    %v141 = vunpack.c.h.b16 %v101
    %v142 = vunpack.c.l.b16 %v102
    %v143 = vunpack.c.h.b16 %v102
    %v144 = vunpack.c.l.b16 %v103
    %v145 = vunpack.c.h.b16 %v103
    %v146 = vunpack.c.l.b16 %v104
    %v147 = vunpack.c.h.b16 %v104
    %v148 = vunpack.c.l.b16 %v105
    %v149 = vunpack.c.h.b16 %v105
    %v150 = vunpack.c.l.b16 %v106
    %v151 = vunpack.c.h.b16 %v106
    %v152 = vunpack.c.l.b16 %v107
    %v153 = vunpack.c.h.b16 %v107
    %v154 = vunpack.c.l.b16 %v108
    %v155 = vunpack.c.h.b16 %v108
    %v156 = vunpack.c.l.b16 %v109
    %v157 = vunpack.c.h.b16 %v109
    %v158 = vpack.c.b16 %v128, %v126
    %v159 = vpack.c.b16 %v129, %v127
    %v160 = vpack.c.b16 %v132, %v130
    %v161 = vpack.c.b16 %v133, %v131
    %v162 = vpack.c.b16 %v136, %v134
    %v163 = vpack.c.b16 %v137, %v135
    %v164 = vpack.c.b16 %v140, %v138
    %v165 = vpack.c.b16 %v141, %v139
    %v166 = vpack.c.b16 %v144, %v142
    %v167 = vpack.c.b16 %v145, %v143
    %v168 = vpack.c.b16 %v148, %v146
    %v169 = vpack.c.b16 %v149, %v147
    %v170 = vpack.c.b16 %v152, %v150
    %v171 = vpack.c.b16 %v153, %v151
    %v172 = vpack.c.b16 %v156, %v154
    %v173 = vpack.c.b16 %v157, %v155
    %190 = vmatprep.subr.bf16.mxu0 %v159
    %191 = vmatpush1.bf16.msra.mxu0 %v158
    %192 = vmatprep.subr.bf16.mxu0 %v161
    %193 = vmatpush1.bf16.msra.mxu0 %v160
    %194 = vmatprep.subr.bf16.mxu0 %v163
    %195 = vmatpush1.bf16.msra.mxu0 %v162
    %196 = vmatprep.subr.bf16.mxu0 %v165
    %197 = vmatpush1.bf16.msra.mxu0 %v164
    %198 = vmatprep.subr.bf16.mxu0 %v167
    %199 = vmatpush1.bf16.msra.mxu0 %v166
    %200 = vmatprep.subr.bf16.mxu0 %v169
    %201 = vmatpush1.bf16.msra.mxu0 %v168
    %202 = vmatprep.subr.bf16.mxu0 %v171
    %203 = vmatpush1.bf16.msra.mxu0 %v170
    %204 = vmatprep.subr.bf16.mxu0 %v173
    %205 = vmatpush1.bf16.msra.mxu0 %v172
    %206 = vmatprep.subr.bf16.mxu0 0
    %207 = vmatpush1.bf16.msra.mxu0 0
    %208 = vmatprep.subr.bf16.mxu0 0
    %209 = vmatpush1.bf16.msra.mxu0 0
    %210 = vmatprep.subr.bf16.mxu0 0
    %211 = vmatpush1.bf16.msra.mxu0 0
    %212 = vmatprep.subr.bf16.mxu0 0
    %213 = vmatpush1.bf16.msra.mxu0 0
    %214 = vmatprep.subr.bf16.mxu0 0
    %215 = vmatpush1.bf16.msra.mxu0 0
    %216 = vmatprep.subr.bf16.mxu0 0
    %217 = vmatpush1.bf16.msra.mxu0 0
    %218 = vmatprep.subr.bf16.mxu0 0
    %219 = vmatpush1.bf16.msra.mxu0 0
    %220 = vmatprep.subr.bf16.mxu0 0
    %221 = vmatpush1.bf16.msra.mxu0 0
    %222 = vmatprep.mubr.bf16.mxu0 0
    %223 = vmatmul.mubr.bf16.gmra.mrb[0].mxu0 %v76
    %v224 = vpop.f32.mrb[0].mxu0
    %v225 = vadd.f32 0.0, %v224
    %v226 = vpop.f32.mrb[0].mxu0
    %v227 = vadd.f32 0.0, %v226
    %v228 = vpop.f32.mrb[0].mxu0
    %v229 = vpop.f32.mrb[0].mxu0
    %230 = vdwg.mxu0
    %v247 = vunpack.c.l.b16 %v77
    %v248 = vunpack.c.h.b16 %v77
    %v249 = vunpack.c.l.b16 %v78
    %v250 = vunpack.c.h.b16 %v78
    %v251 = vunpack.c.l.b16 %v79
    %v252 = vunpack.c.h.b16 %v79
    %v253 = vunpack.c.l.b16 %v80
    %v254 = vunpack.c.h.b16 %v80
    %v255 = vunpack.c.l.b16 %v81
    %v256 = vunpack.c.h.b16 %v81
    %v257 = vunpack.c.l.b16 %v82
    %v258 = vunpack.c.h.b16 %v82
    %v259 = vunpack.c.l.b16 %v83
    %v260 = vunpack.c.h.b16 %v83
    %v261 = vunpack.c.l.b16 %v84
    %v262 = vunpack.c.h.b16 %v84
    %v263 = vunpack.c.l.b16 %v85
    %v264 = vunpack.c.h.b16 %v85
    %v265 = vunpack.c.l.b16 %v86
    %v266 = vunpack.c.h.b16 %v86
    %v267 = vunpack.c.l.b16 %v87
    %v268 = vunpack.c.h.b16 %v87
    %v269 = vunpack.c.l.b16 %v88
    %v270 = vunpack.c.h.b16 %v88
    %v271 = vunpack.c.l.b16 %v89
    %v272 = vunpack.c.h.b16 %v89
    %v273 = vunpack.c.l.b16 %v90
    %v274 = vunpack.c.h.b16 %v90
    %v275 = vunpack.c.l.b16 %v91
    %v276 = vunpack.c.h.b16 %v91
    %v277 = vunpack.c.l.b16 %v92
    %v278 = vunpack.c.h.b16 %v92
    %v279 = vpack.c.b16 %v249, %v247
    %v280 = vpack.c.b16 %v250, %v248
    %v281 = vpack.c.b16 %v253, %v251
    %v282 = vpack.c.b16 %v254, %v252
    %v283 = vpack.c.b16 %v257, %v255
    %v284 = vpack.c.b16 %v258, %v256
    %v285 = vpack.c.b16 %v261, %v259
    %v286 = vpack.c.b16 %v262, %v260
    %v287 = vpack.c.b16 %v265, %v263
    %v288 = vpack.c.b16 %v266, %v264
    %v289 = vpack.c.b16 %v269, %v267
    %v290 = vpack.c.b16 %v270, %v268
    %v291 = vpack.c.b16 %v273, %v271
    %v292 = vpack.c.b16 %v274, %v272
    %v293 = vpack.c.b16 %v277, %v275
    %v294 = vpack.c.b16 %v278, %v276
    %311 = vmatprep.subr.bf16.mxu0 %v280
    %312 = vmatpush1.bf16.msra.mxu0 %v279
    %313 = vmatprep.subr.bf16.mxu0 %v282
    %314 = vmatpush1.bf16.msra.mxu0 %v281
    %315 = vmatprep.subr.bf16.mxu0 %v284
    %316 = vmatpush1.bf16.msra.mxu0 %v283
    %317 = vmatprep.subr.bf16.mxu0 %v286
    %318 = vmatpush1.bf16.msra.mxu0 %v285
    %319 = vmatprep.subr.bf16.mxu0 %v288
    %320 = vmatpush1.bf16.msra.mxu0 %v287
    %321 = vmatprep.subr.bf16.mxu0 %v290
    %322 = vmatpush1.bf16.msra.mxu0 %v289
    %323 = vmatprep.subr.bf16.mxu0 %v292
    %324 = vmatpush1.bf16.msra.mxu0 %v291
    %325 = vmatprep.subr.bf16.mxu0 %v294
    %326 = vmatpush1.bf16.msra.mxu0 %v293
    %327 = vmatprep.subr.bf16.mxu0 0
    %328 = vmatpush1.bf16.msra.mxu0 0
    %329 = vmatprep.subr.bf16.mxu0 0
    %330 = vmatpush1.bf16.msra.mxu0 0
    %331 = vmatprep.subr.bf16.mxu0 0
    %332 = vmatpush1.bf16.msra.mxu0 0
    %333 = vmatprep.subr.bf16.mxu0 0
    %334 = vmatpush1.bf16.msra.mxu0 0
    %335 = vmatprep.subr.bf16.mxu0 0
    %336 = vmatpush1.bf16.msra.mxu0 0
    %337 = vmatprep.subr.bf16.mxu0 0
    %338 = vmatpush1.bf16.msra.mxu0 0
    %339 = vmatprep.subr.bf16.mxu0 0
    %340 = vmatpush1.bf16.msra.mxu0 0
    %341 = vmatprep.subr.bf16.mxu0 0
    %342 = vmatpush1.bf16.msra.mxu0 0
    %343 = vmatprep.mubr.bf16.mxu0 0
    %344 = vmatmul.mubr.bf16.gmra.mrb[0].mxu0 %v76
    %v345 = vpop.f32.mrb[0].mxu0
    %v346 = vadd.f32 %v225, %v345
    %v347 = vpop.f32.mrb[0].mxu0
    %v348 = vadd.f32 %v227, %v347
    %v349 = vpop.f32.mrb[0].mxu0
    %v350 = vpop.f32.mrb[0].mxu0
    %351 = vdwg.mxu0
    %s352 = scalar_lea.vmem [#allocation2], 256
    %v353 = vld [vmem:[%s352] sm:$0xff]
    %v354 = vld [vmem:[%s352 + $0x8] sm:$0xff]
    %v355 = vld [vmem:[%s352 + $0x10] sm:$0xff]
    %v356 = vld [vmem:[%s352 + $0x18] sm:$0xff]
    %v357 = vld [vmem:[%s352 + $0x20] sm:$0xff]
    %v358 = vld [vmem:[%s352 + $0x28] sm:$0xff]
    %v359 = vld [vmem:[%s352 + $0x30] sm:$0xff]
    %v360 = vld [vmem:[%s352 + $0x38] sm:$0xff]
    %v361 = vld [vmem:[%s352 + $0x40] sm:$0xff]
    %v362 = vld [vmem:[%s352 + $0x48] sm:$0xff]
    %v363 = vld [vmem:[%s352 + $0x50] sm:$0xff]
    %v364 = vld [vmem:[%s352 + $0x58] sm:$0xff]
    %v365 = vld [vmem:[%s352 + $0x60] sm:$0xff]
    %v366 = vld [vmem:[%s352 + $0x68] sm:$0xff]
    %v367 = vld [vmem:[%s352 + $0x70] sm:$0xff]
    %v368 = vld [vmem:[%s352 + $0x78] sm:$0xff]
    %v385 = vunpack.c.l.b16 %v353
    %v386 = vunpack.c.h.b16 %v353
    %v387 = vunpack.c.l.b16 %v354
    %v388 = vunpack.c.h.b16 %v354
    %v389 = vunpack.c.l.b16 %v355
    %v390 = vunpack.c.h.b16 %v355
    %v391 = vunpack.c.l.b16 %v356
    %v392 = vunpack.c.h.b16 %v356
    %v393 = vunpack.c.l.b16 %v357
    %v394 = vunpack.c.h.b16 %v357
    %v395 = vunpack.c.l.b16 %v358
    %v396 = vunpack.c.h.b16 %v358
    %v397 = vunpack.c.l.b16 %v359
    %v398 = vunpack.c.h.b16 %v359
    %v399 = vunpack.c.l.b16 %v360
    %v400 = vunpack.c.h.b16 %v360
    %v401 = vunpack.c.l.b16 %v361
    %v402 = vunpack.c.h.b16 %v361
    %v403 = vunpack.c.l.b16 %v362
    %v404 = vunpack.c.h.b16 %v362
    %v405 = vunpack.c.l.b16 %v363
    %v406 = vunpack.c.h.b16 %v363
    %v407 = vunpack.c.l.b16 %v364
    %v408 = vunpack.c.h.b16 %v364
    %v409 = vunpack.c.l.b16 %v365
    %v410 = vunpack.c.h.b16 %v365
    %v411 = vunpack.c.l.b16 %v366
    %v412 = vunpack.c.h.b16 %v366
    %v413 = vunpack.c.l.b16 %v367
    %v414 = vunpack.c.h.b16 %v367
    %v415 = vunpack.c.l.b16 %v368
    %v416 = vunpack.c.h.b16 %v368
    %v417 = vpack.c.b16 %v387, %v385
    %v418 = vpack.c.b16 %v388, %v386
    %v419 = vpack.c.b16 %v391, %v389
    %v420 = vpack.c.b16 %v392, %v390
    %v421 = vpack.c.b16 %v395, %v393
    %v422 = vpack.c.b16 %v396, %v394
    %v423 = vpack.c.b16 %v399, %v397
    %v424 = vpack.c.b16 %v400, %v398
    %v425 = vpack.c.b16 %v403, %v401
    %v426 = vpack.c.b16 %v404, %v402
    %v427 = vpack.c.b16 %v407, %v405
    %v428 = vpack.c.b16 %v408, %v406
    %v429 = vpack.c.b16 %v411, %v409
    %v430 = vpack.c.b16 %v412, %v410
    %v431 = vpack.c.b16 %v415, %v413
    %v432 = vpack.c.b16 %v416, %v414
    %449 = vmatprep.subr.bf16.mxu0 %v418
    %450 = vmatpush1.bf16.msra.mxu0 %v417
    %451 = vmatprep.subr.bf16.mxu0 %v420
    %452 = vmatpush1.bf16.msra.mxu0 %v419
    %453 = vmatprep.subr.bf16.mxu0 %v422
    %454 = vmatpush1.bf16.msra.mxu0 %v421
    %455 = vmatprep.subr.bf16.mxu0 %v424
    %456 = vmatpush1.bf16.msra.mxu0 %v423
    %457 = vmatprep.subr.bf16.mxu0 %v426
    %458 = vmatpush1.bf16.msra.mxu0 %v425
    %459 = vmatprep.subr.bf16.mxu0 %v428
    %460 = vmatpush1.bf16.msra.mxu0 %v427
    %461 = vmatprep.subr.bf16.mxu0 %v430
    %462 = vmatpush1.bf16.msra.mxu0 %v429
    %463 = vmatprep.subr.bf16.mxu0 %v432
    %464 = vmatpush1.bf16.msra.mxu0 %v431
    %465 = vmatprep.subr.bf16.mxu0 0
    %466 = vmatpush1.bf16.msra.mxu0 0
    %467 = vmatprep.subr.bf16.mxu0 0
    %468 = vmatpush1.bf16.msra.mxu0 0
    %469 = vmatprep.subr.bf16.mxu0 0
    %470 = vmatpush1.bf16.msra.mxu0 0
    %471 = vmatprep.subr.bf16.mxu0 0
    %472 = vmatpush1.bf16.msra.mxu0 0
    %473 = vmatprep.subr.bf16.mxu0 0
    %474 = vmatpush1.bf16.msra.mxu0 0
    %475 = vmatprep.subr.bf16.mxu0 0
    %476 = vmatpush1.bf16.msra.mxu0 0
    %477 = vmatprep.subr.bf16.mxu0 0
    %478 = vmatpush1.bf16.msra.mxu0 0
    %479 = vmatprep.subr.bf16.mxu0 0
    %480 = vmatpush1.bf16.msra.mxu0 0
    %481 = vmatprep.mubr.bf16.mxu0 0
    %482 = vmatmul.mubr.bf16.gmra.mrb[0].mxu0 %v76
    %v483 = vpop.f32.mrb[0].mxu0
    %v484 = vadd.f32 0.0, %v483
    %v485 = vpop.f32.mrb[0].mxu0
    %v486 = vadd.f32 0.0, %v485
    %v487 = vpop.f32.mrb[0].mxu0
    %v488 = vpop.f32.mrb[0].mxu0
    %489 = vdwg.mxu0
    %v490 = vadd.f32 %v346, %v484
    %v491 = vadd.f32 %v348, %v486
    %492 = vst [vmem:[%s2] sm:$0xff] %v490
    %493 = vst [vmem:[%s2 + $0x8] sm:$0xff] %v491
    // Predicated region
    $region14: #{type_embedding_packed.1} parent=1 // pred_check
      _
    $region15: #{type_embedding_packed.1} parent=1 // pred_check_branch
      %495 = sbr.rel (0) target = $region17
    $region16: #{type_embedding_packed.1} parent=1 // pred_region
      _
    $region17: #{type_embedding_packed.1} parent=1 // pred_fallthru
      _
    // Predicated region
    $region18: #{type_embedding_packed.1} parent=1 // pred_check
      _
    $region19: #{type_embedding_packed.1} parent=1 // pred_check_branch
      %497 = sbr.rel (0) target = $region21
    $region20: #{type_embedding_packed.1} parent=1 // pred_region
      _
    $region21: #{type_embedding_packed.1} parent=1 // pred_fallthru
      _
    %498 = vsyncpa [#allocation3], 1

</llo_original>
